<compile_context>
chip_gen: v5e
topology: v5e:2x2
jax: 0.10.0
libtpu: 0.0.40
codegen_flags: <defaults>
</compile_context>

<pallas_src>
import functools

import jax
import jax.numpy as jnp
from jax import lax
from jax.experimental import pallas as pl
from jax.experimental.pallas import tpu as pltpu

HIDDEN = 256
NOUT_PAD = 128  # lane-dense padded width of the final layer


def _ann_kernel(x_ref, w1_ref, b1_ref, w2_ref, b2_ref,
                w3_ref, b3_ref, w4_ref, b4_ref, o_ref,
                *, sub_b, num_sub):
    # Weights are bf16 (MXU operands); biases are f32.
    w1 = w1_ref[...]
    w2 = w2_ref[...]
    w3 = w3_ref[...]
    w4 = w4_ref[...]
    b1 = b1_ref[...]
    b2 = b2_ref[...]
    b3 = b3_ref[...]
    b4 = b4_ref[...]

    def chain(x_sub):
        # Layer 1: Linear(input_size, 256) + LeakyReLU(0.1)
        h = jnp.dot(x_sub, w1, preferred_element_type=jnp.float32) + b1
        h = jnp.where(h > 0, h, 0.1 * h)
        # Layer 2: Linear(256, 256) + ReLU
        h = jnp.dot(h.astype(jnp.bfloat16), w2,
                    preferred_element_type=jnp.float32) + b2
        h = jnp.maximum(h, 0.0)
        # Layer 3: Linear(256, 256) + ReLU
        h = jnp.dot(h.astype(jnp.bfloat16), w3,
                    preferred_element_type=jnp.float32) + b3
        h = jnp.maximum(h, 0.0)
        # Layer 4: Linear(256, 1 -> padded 128) + Sigmoid
        h = jnp.dot(h.astype(jnp.bfloat16), w4,
                    preferred_element_type=jnp.float32) + b4
        return jax.nn.sigmoid(h)

    def body(i, carry):
        start = pl.multiple_of(i * sub_b, sub_b)
        x_sub = x_ref[pl.ds(start, sub_b), :]
        o_ref[pl.ds(start, sub_b), :] = chain(x_sub)
        return carry

    lax.fori_loop(0, num_sub, body, 0, unroll=True)


@functools.partial(jax.jit, static_argnames=("block_b",))
def ann_forward(x, params, block_b=256):
    """x: [B, input_size] float32 -> [B, 1] float32."""
    w1, b1, w2, b2, w3, b3, w4, b4 = params
    B, D = x.shape
    H = HIDDEN

    # --- wrapper-side prep (done once, outside the hot loop) ---------------
    # Pad the last layer to a lane-dense 128-column output.
    w4p = jnp.zeros((H, NOUT_PAD), jnp.float32).at[:, :1].set(w4)
    b4p = jnp.zeros((1, NOUT_PAD), jnp.float32).at[:, :1].set(b4)

    # bf16 operands for the MXU (accumulation stays f32 inside the kernel).
    xb = x.astype(jnp.bfloat16)
    w1b = w1.astype(jnp.bfloat16)
    w2b = w2.astype(jnp.bfloat16)
    w3b = w3.astype(jnp.bfloat16)
    w4b = w4p.astype(jnp.bfloat16)

    # --- tiling ------------------------------------------------------------
    def round_up(v, m):
        return ((v + m - 1) // m) * m

    block_b = min(block_b, round_up(B, 8))          # clamp for tiny batches
    if block_b >= 256 and block_b % 128 == 0:
        sub_b = 128                                  # keep chain in vregs
    else:
        sub_b = block_b
    num_sub = block_b // sub_b
    grid = (pl.cdiv(B, block_b),)

    def x_map(i):
        return (i, 0)

    def full_map(i):
        return (0, 0)

    kernel = functools.partial(_ann_kernel, sub_b=sub_b, num_sub=num_sub)

    flops = 2 * B * (D * H + H * H + H * H + H * NOUT_PAD)
    bytes_accessed = (2 * B * D                              # bf16 x
                      + 2 * (D * H + 2 * H * H + H * NOUT_PAD)  # bf16 weights
                      + 4 * (3 * H + NOUT_PAD)               # f32 biases
                      + 4 * B * NOUT_PAD)                    # f32 output
    cost = pl.CostEstimate(flops=flops,
                           transcendentals=B * NOUT_PAD,
                           bytes_accessed=bytes_accessed)

    out = pl.pallas_call(
        kernel,
        out_shape=jax.ShapeDtypeStruct((B, NOUT_PAD), jnp.float32),
        grid_spec=pltpu.PrefetchScalarGridSpec(
            num_scalar_prefetch=0,
            grid=grid,
            in_specs=[
                pl.BlockSpec((block_b, D), x_map),          # x tile (bf16)
                pl.BlockSpec((D, H), full_map),             # W1 (bf16)
                pl.BlockSpec((1, H), full_map),             # b1 (f32)
                pl.BlockSpec((H, H), full_map),             # W2 (bf16)
                pl.BlockSpec((1, H), full_map),             # b2 (f32)
                pl.BlockSpec((H, H), full_map),             # W3 (bf16)
                pl.BlockSpec((1, H), full_map),             # b3 (f32)
                pl.BlockSpec((H, NOUT_PAD), full_map),      # W4 padded (bf16)
                pl.BlockSpec((1, NOUT_PAD), full_map),      # b4 padded (f32)
            ],
            out_specs=pl.BlockSpec((block_b, NOUT_PAD), x_map),
        ),
        compiler_params=pltpu.CompilerParams(
            dimension_semantics=("parallel",)),
        cost_estimate=cost,
    )(xb, w1b, b1, w2b, b2, w3b, b3, w4b, b4p)

    return out[:, :1]


def init_params(key, input_size, hidden=HIDDEN):
    """Deterministic init mimicking nn.Linear default (U[-1/sqrt(fan_in), +])."""
    def linear(key, fan_in, fan_out):
        kw, kb = jax.random.split(key)
        bound = 1.0 / jnp.sqrt(float(fan_in))
        w = jax.random.uniform(kw, (fan_in, fan_out), jnp.float32,
                               minval=-bound, maxval=bound)
        b = jax.random.uniform(kb, (1, fan_out), jnp.float32,
                               minval=-bound, maxval=bound)
        return w, b

    k1, k2, k3, k4 = jax.random.split(key, 4)
    w1, b1 = linear(k1, input_size, hidden)
    w2, b2 = linear(k2, hidden, hidden)
    w3, b3 = linear(k3, hidden, hidden)
    w4, b4 = linear(k4, hidden, 1)
    return (w1, b1, w2, b2, w3, b3, w4, b4)


def ann_reference_f32(x, params):
    w1, b1, w2, b2, w3, b3, w4, b4 = params
    h = x @ w1 + b1
    h = jnp.where(h > 0, h, 0.1 * h)
    h = jnp.maximum(h @ w2 + b2, 0.0)
    h = jnp.maximum(h @ w3 + b3, 0.0)
    return jax.nn.sigmoid(h @ w4 + b4)


def ann_reference_bf16(x, params):
    """Reference with the same bf16-operand / f32-accumulate scheme as the kernel."""
    w1, b1, w2, b2, w3, b3, w4, b4 = params
    bf = jnp.bfloat16
    dot = lambda a, b: jnp.dot(a.astype(bf), b.astype(bf),
                               preferred_element_type=jnp.float32)
    h = dot(x, w1) + b1
    h = jnp.where(h > 0, h, 0.1 * h)
    h = jnp.maximum(dot(h, w2) + b2, 0.0)
    h = jnp.maximum(dot(h, w3) + b3, 0.0)
    return jax.nn.sigmoid(dot(h, w4) + b4)


if __name__ == "__main__":
    key = jax.random.PRNGKey(0)
    kx, kp = jax.random.split(key)

    input_size = 32
    batch = 8

    x = jax.random.normal(kx, (batch, input_size), jnp.float32)
    params = init_params(kp, input_size)

    out = ann_forward(x, params)
    out = jax.block_until_ready(out)
    assert out.shape == (batch, 1)

    # Bit-for-bit-ish check against a reference using the same bf16 matmuls.
    ref_bf16 = ann_reference_bf16(x, params)
    assert jnp.allclose(out, ref_bf16, atol=1e-4, rtol=1e-4), (
        f"max abs err vs bf16 ref: {jnp.max(jnp.abs(out - ref_bf16))}")

    # Loose check against the full-f32 reference (bf16 matmul rounding only).
    ref_f32 = ann_reference_f32(x, params)
    assert jnp.allclose(out, ref_f32, atol=3e-2), (
        f"max abs err vs f32 ref: {jnp.max(jnp.abs(out - ref_f32))}")

    print("KERNEL_OK")
</pallas_src>

<mosaic_0001>
module attributes {stable_mosaic.version = 11 : i64} {
  func.func @_ann_kernel(%arg0: i32, %arg1: memref<8x32xbf16, #tpu.memory_space<vmem>>, %arg2: memref<32x256xbf16, #tpu.memory_space<vmem>>, %arg3: memref<1x256xf32, #tpu.memory_space<vmem>>, %arg4: memref<256x256xbf16, #tpu.memory_space<vmem>>, %arg5: memref<1x256xf32, #tpu.memory_space<vmem>>, %arg6: memref<256x256xbf16, #tpu.memory_space<vmem>>, %arg7: memref<1x256xf32, #tpu.memory_space<vmem>>, %arg8: memref<256x128xbf16, #tpu.memory_space<vmem>>, %arg9: memref<1x128xf32, #tpu.memory_space<vmem>>, %arg10: memref<8x128xf32, #tpu.memory_space<vmem>>) attributes {dimension_semantics = [#tpu.dimension_semantics<parallel>], iteration_bounds = array<i64: 1>, scalar_prefetch = 0 : i64, scratch_operands = 0 : i64, tpu.core_type = #tpu.core_type<tc>, window_params = [{transform_indices = @transform_0, window_bounds = array<i64: 8, 32>}, {pipeline_mode = #tpu.pipeline_mode<synchronous>, transform_indices = @transform_1, window_bounds = array<i64: 32, 256>}, {pipeline_mode = #tpu.pipeline_mode<synchronous>, transform_indices = @transform_2, window_bounds = array<i64: 1, 256>}, {pipeline_mode = #tpu.pipeline_mode<synchronous>, transform_indices = @transform_3, window_bounds = array<i64: 256, 256>}, {pipeline_mode = #tpu.pipeline_mode<synchronous>, transform_indices = @transform_4, window_bounds = array<i64: 1, 256>}, {pipeline_mode = #tpu.pipeline_mode<synchronous>, transform_indices = @transform_5, window_bounds = array<i64: 256, 256>}, {pipeline_mode = #tpu.pipeline_mode<synchronous>, transform_indices = @transform_6, window_bounds = array<i64: 1, 256>}, {pipeline_mode = #tpu.pipeline_mode<synchronous>, transform_indices = @transform_7, window_bounds = array<i64: 256, 128>}, {pipeline_mode = #tpu.pipeline_mode<synchronous>, transform_indices = @transform_8, window_bounds = array<i64: 1, 128>}, {transform_indices = @transform_9, window_bounds = array<i64: 8, 128>}]} {
    %c0 = arith.constant 0 : index
    %c0_0 = arith.constant 0 : index
    %0 = vector.load %arg2[%c0, %c0_0] : memref<32x256xbf16, #tpu.memory_space<vmem>>, vector<32x256xbf16>
    %c0_1 = arith.constant 0 : index
    %c0_2 = arith.constant 0 : index
    %1 = vector.load %arg4[%c0_1, %c0_2] : memref<256x256xbf16, #tpu.memory_space<vmem>>, vector<256x256xbf16>
    %c0_3 = arith.constant 0 : index
    %c0_4 = arith.constant 0 : index
    %2 = vector.load %arg6[%c0_3, %c0_4] : memref<256x256xbf16, #tpu.memory_space<vmem>>, vector<256x256xbf16>
    %c0_5 = arith.constant 0 : index
    %c0_6 = arith.constant 0 : index
    %3 = vector.load %arg8[%c0_5, %c0_6] : memref<256x128xbf16, #tpu.memory_space<vmem>>, vector<256x128xbf16>
    %c0_7 = arith.constant 0 : index
    %c0_8 = arith.constant 0 : index
    %4 = vector.load %arg3[%c0_7, %c0_8] : memref<1x256xf32, #tpu.memory_space<vmem>>, vector<1x256xf32>
    %c0_9 = arith.constant 0 : index
    %c0_10 = arith.constant 0 : index
    %5 = vector.load %arg5[%c0_9, %c0_10] : memref<1x256xf32, #tpu.memory_space<vmem>>, vector<1x256xf32>
    %c0_11 = arith.constant 0 : index
    %c0_12 = arith.constant 0 : index
    %6 = vector.load %arg7[%c0_11, %c0_12] : memref<1x256xf32, #tpu.memory_space<vmem>>, vector<1x256xf32>
    %c0_13 = arith.constant 0 : index
    %c0_14 = arith.constant 0 : index
    %7 = vector.load %arg9[%c0_13, %c0_14] : memref<1x128xf32, #tpu.memory_space<vmem>>, vector<1x128xf32>
    %c0_i32 = arith.constant 0 : i32
    %c8_i32 = arith.constant 8 : i32
    %8 = arith.muli %c0_i32, %c8_i32 : i32
    %9 = tpu.assume_multiple %8, 8 : i32
    %10 = arith.index_cast %9 : i32 to index
    %c0_15 = arith.constant 0 : index
    %11 = vector.load %arg1[%10, %c0_15] : memref<8x32xbf16, #tpu.memory_space<vmem>>, vector<8x32xbf16>
    %cst = arith.constant dense<0.000000e+00> : vector<8x256xf32>
    %12 = tpu.matmul %11, %0, %cst {dimension_numbers = #tpu.dot_dimension_numbers<[1], [0], [0], [1], [0, 0, 1, 1], [], []>} : vector<8x32xbf16>, vector<32x256xbf16>, vector<8x256xf32> -> vector<8x256xf32>
    %13 = vector.broadcast %4 : vector<1x256xf32> to vector<8x256xf32>
    %14 = arith.addf %12, %13 : vector<8x256xf32>
    %cst_16 = arith.constant 0.000000e+00 : f32
    %15 = vector.broadcast %cst_16 : f32 to vector<8x256xf32>
    %16 = arith.cmpf ogt, %14, %15 : vector<8x256xf32>
    %cst_17 = arith.constant 1.000000e-01 : f32
    %17 = vector.broadcast %cst_17 : f32 to vector<8x256xf32>
    %18 = arith.mulf %17, %14 : vector<8x256xf32>
    %19 = arith.select %16, %14, %18 : vector<8x256xi1>, vector<8x256xf32>
    %20 = arith.truncf %19 : vector<8x256xf32> to vector<8x256xbf16>
    %cst_18 = arith.constant dense<0.000000e+00> : vector<8x256xf32>
    %21 = tpu.matmul %20, %1, %cst_18 {dimension_numbers = #tpu.dot_dimension_numbers<[1], [0], [0], [1], [0, 0, 1, 1], [], []>} : vector<8x256xbf16>, vector<256x256xbf16>, vector<8x256xf32> -> vector<8x256xf32>
    %22 = vector.broadcast %5 : vector<1x256xf32> to vector<8x256xf32>
    %23 = arith.addf %21, %22 : vector<8x256xf32>
    %cst_19 = arith.constant 0.000000e+00 : f32
    %24 = vector.broadcast %cst_19 : f32 to vector<8x256xf32>
    %25 = arith.maximumf %23, %24 : vector<8x256xf32>
    %26 = arith.truncf %25 : vector<8x256xf32> to vector<8x256xbf16>
    %cst_20 = arith.constant dense<0.000000e+00> : vector<8x256xf32>
    %27 = tpu.matmul %26, %2, %cst_20 {dimension_numbers = #tpu.dot_dimension_numbers<[1], [0], [0], [1], [0, 0, 1, 1], [], []>} : vector<8x256xbf16>, vector<256x256xbf16>, vector<8x256xf32> -> vector<8x256xf32>
    %28 = vector.broadcast %6 : vector<1x256xf32> to vector<8x256xf32>
    %29 = arith.addf %27, %28 : vector<8x256xf32>
    %cst_21 = arith.constant 0.000000e+00 : f32
    %30 = vector.broadcast %cst_21 : f32 to vector<8x256xf32>
    %31 = arith.maximumf %29, %30 : vector<8x256xf32>
    %32 = arith.truncf %31 : vector<8x256xf32> to vector<8x256xbf16>
    %cst_22 = arith.constant dense<0.000000e+00> : vector<8x128xf32>
    %33 = tpu.matmul %32, %3, %cst_22 {dimension_numbers = #tpu.dot_dimension_numbers<[1], [0], [0], [1], [0, 0, 1, 1], [], []>} : vector<8x256xbf16>, vector<256x128xbf16>, vector<8x128xf32> -> vector<8x128xf32>
    %34 = vector.broadcast %7 : vector<1x128xf32> to vector<8x128xf32>
    %35 = arith.addf %33, %34 : vector<8x128xf32>
    %36 = arith.negf %35 : vector<8x128xf32>
    %37 = math.exp %36 : vector<8x128xf32>
    %cst_23 = arith.constant 1.000000e+00 : f32
    %38 = vector.broadcast %cst_23 : f32 to vector<8x128xf32>
    %39 = arith.addf %38, %37 : vector<8x128xf32>
    %40 = arith.divf %38, %39 : vector<8x128xf32>
    %41 = arith.index_cast %9 : i32 to index
    %c0_24 = arith.constant 0 : index
    %42 = vector.load %arg10[%41, %c0_24] : memref<8x128xf32, #tpu.memory_space<vmem>>, vector<8x128xf32>
    tpu.vector_store %arg10[%41, %c0_24], %40 {strides = array<i32>} : memref<8x128xf32, #tpu.memory_space<vmem>>, vector<8x128xf32>,
    %c1_i32 = arith.constant 1 : i32
    return
  }
  func.func @transform_0(%arg0: i32) -> (i32, i32) {
    %c0_i32 = arith.constant 0 : i32
    %c0_i32_0 = arith.constant 0 : i32
    return %arg0, %c0_i32 : i32, i32
  }
  func.func @transform_1(%arg0: i32) -> (i32, i32) {
    %c0_i32 = arith.constant 0 : i32
    %c0_i32_0 = arith.constant 0 : i32
    %c0_i32_1 = arith.constant 0 : i32
    return %c0_i32, %c0_i32_0 : i32, i32
  }
  func.func @transform_2(%arg0: i32) -> (i32, i32) {
    %c0_i32 = arith.constant 0 : i32
    %c0_i32_0 = arith.constant 0 : i32
    %c0_i32_1 = arith.constant 0 : i32
    return %c0_i32, %c0_i32_0 : i32, i32
  }
  func.func @transform_3(%arg0: i32) -> (i32, i32) {
    %c0_i32 = arith.constant 0 : i32
    %c0_i32_0 = arith.constant 0 : i32
    %c0_i32_1 = arith.constant 0 : i32
    return %c0_i32, %c0_i32_0 : i32, i32
  }
  func.func @transform_4(%arg0: i32) -> (i32, i32) {
    %c0_i32 = arith.constant 0 : i32
    %c0_i32_0 = arith.constant 0 : i32
    %c0_i32_1 = arith.constant 0 : i32
    return %c0_i32, %c0_i32_0 : i32, i32
  }
  func.func @transform_5(%arg0: i32) -> (i32, i32) {
    %c0_i32 = arith.constant 0 : i32
    %c0_i32_0 = arith.constant 0 : i32
    %c0_i32_1 = arith.constant 0 : i32
    return %c0_i32, %c0_i32_0 : i32, i32
  }
  func.func @transform_6(%arg0: i32) -> (i32, i32) {
    %c0_i32 = arith.constant 0 : i32
    %c0_i32_0 = arith.constant 0 : i32
    %c0_i32_1 = arith.constant 0 : i32
    return %c0_i32, %c0_i32_0 : i32, i32
  }
  func.func @transform_7(%arg0: i32) -> (i32, i32) {
    %c0_i32 = arith.constant 0 : i32
    %c0_i32_0 = arith.constant 0 : i32
    %c0_i32_1 = arith.constant 0 : i32
    return %c0_i32, %c0_i32_0 : i32, i32
  }
  func.func @transform_8(%arg0: i32) -> (i32, i32) {
    %c0_i32 = arith.constant 0 : i32
    %c0_i32_0 = arith.constant 0 : i32
    %c0_i32_1 = arith.constant 0 : i32
    return %c0_i32, %c0_i32_0 : i32, i32
  }
  func.func @transform_9(%arg0: i32) -> (i32, i32) {
    %c0_i32 = arith.constant 0 : i32
    %c0_i32_0 = arith.constant 0 : i32
    return %arg0, %c0_i32 : i32, i32
  }
}

</mosaic_0001>

<llo_original>
// kernel: ann_forward.1
$region0: #{ann_forward.1}
  #allocation0 [shape = 'u32[]', space=smem, size = 0x4, offset = 0x4, fixed_abs, tag = 'smem constant byte address 0x4 - core index']
  #allocation1 [shape = 'u32[72,128]{1,0:T(1,128)}', space=vmem, size = 0x9000, scoped, tag = 'internal scratch']
  %s0 = inlined_call_operand.vmem [shape: bf16[8,32], index: 0, kind: input, shape index: {}]
  %s1 = inlined_call_operand.vmem [shape: bf16[32,256], index: 1, kind: input, shape index: {}]
  %s2 = inlined_call_operand.vmem [shape: f32[1,256], index: 2, kind: input, shape index: {}]
  %s3 = inlined_call_operand.vmem [shape: bf16[256,256], index: 3, kind: input, shape index: {}]
  %s4 = inlined_call_operand.vmem [shape: f32[1,256], index: 4, kind: input, shape index: {}]
  %s5 = inlined_call_operand.vmem [shape: bf16[256,256], index: 5, kind: input, shape index: {}]
  %s6 = inlined_call_operand.vmem [shape: f32[1,256], index: 6, kind: input, shape index: {}]
  %s7 = inlined_call_operand.vmem [shape: bf16[256,128], index: 7, kind: input, shape index: {}]
  %s8 = inlined_call_operand.vmem [shape: f32[1,128], index: 8, kind: input, shape index: {}]
  %s9 = inlined_call_operand.vmem [shape: f32[8,128], index: 9, kind: output, shape index: {}]
  %s10 = sld [smem:[#allocation0]]
  $region46: #{ann_forward.1} parent=0
    _
  %s12 = ssub.s32 1, %s10
  %s13 = scalar_select 0, %s12, %s10
  // Predicated region
  $region2: #{ann_forward.1} parent=0 // pred_check
    _
  $region3: #{ann_forward.1} parent=0 // pred_check_branch
    %15 = sbr.rel (0) target = $region5
  $region4: #{ann_forward.1} parent=0 // pred_region
    _
  $region5: #{ann_forward.1} parent=0 // pred_fallthru
    _
  // Predicated region
  $region6: #{ann_forward.1} parent=0 // pred_check
    _
  $region7: #{ann_forward.1} parent=0 // pred_check_branch
    %17 = sbr.rel (0) target = $region9
  $region8: #{ann_forward.1} parent=0 // pred_region
    _
  $region9: #{ann_forward.1} parent=0 // pred_fallthru
    _
  // Predicated region
  $region10: #{ann_forward.1} parent=0 // pred_check
    _
  $region11: #{ann_forward.1} parent=0 // pred_check_branch
    %19 = sbr.rel (0) target = $region13
  $region12: #{ann_forward.1} parent=0 // pred_region
    _
  $region13: #{ann_forward.1} parent=0 // pred_fallthru
    _
  // Predicated region
  $region14: #{ann_forward.1} parent=0 // pred_check
    _
  $region15: #{ann_forward.1} parent=0 // pred_check_branch
    %21 = sbr.rel (0) target = $region17
  $region16: #{ann_forward.1} parent=0 // pred_region
    _
  $region17: #{ann_forward.1} parent=0 // pred_fallthru
    _
  // Predicated region
  $region18: #{ann_forward.1} parent=0 // pred_check
    _
  $region19: #{ann_forward.1} parent=0 // pred_check_branch
    %23 = sbr.rel (0) target = $region21
  $region20: #{ann_forward.1} parent=0 // pred_region
    _
  $region21: #{ann_forward.1} parent=0 // pred_fallthru
    _
  // Predicated region
  $region22: #{ann_forward.1} parent=0 // pred_check
    _
  $region23: #{ann_forward.1} parent=0 // pred_check_branch
    %25 = sbr.rel (0) target = $region25
  $region24: #{ann_forward.1} parent=0 // pred_region
    _
  $region25: #{ann_forward.1} parent=0 // pred_fallthru
    _
  // Predicated region
  $region26: #{ann_forward.1} parent=0 // pred_check
    _
  $region27: #{ann_forward.1} parent=0 // pred_check_branch
    %27 = sbr.rel (0) target = $region29
  $region28: #{ann_forward.1} parent=0 // pred_region
    _
  $region29: #{ann_forward.1} parent=0 // pred_fallthru
    _
  // Predicated region
  $region30: #{ann_forward.1} parent=0 // pred_check
    _
  $region31: #{ann_forward.1} parent=0 // pred_check_branch
    %29 = sbr.rel (0) target = $region33
  $region32: #{ann_forward.1} parent=0 // pred_region
    _
  $region33: #{ann_forward.1} parent=0 // pred_fallthru
    _
  // Predicated region
  $region34: #{ann_forward.1} parent=0 // pred_check
    _
  $region35: #{ann_forward.1} parent=0 // pred_check_branch
    %31 = sbr.rel (0) target = $region37
  $region36: #{ann_forward.1} parent=0 // pred_region
    _
  $region37: #{ann_forward.1} parent=0 // pred_fallthru
    _
  %v33 = vld [vmem:[%s1] sm:$0xff]
  %v34 = vld [vmem:[%s1 + $0x8] sm:$0xff]
  %v35 = vld [vmem:[%s1 + $0x10] sm:$0xff]
  %v36 = vld [vmem:[%s1 + $0x18] sm:$0xff]
  %v37 = vld [vmem:[%s3] sm:$0xff]
  %v38 = vld [vmem:[%s3 + $0x8] sm:$0xff]
  %v39 = vld [vmem:[%s3 + $0x10] sm:$0xff]
  %v40 = vld [vmem:[%s3 + $0x18] sm:$0xff]
  %v41 = vld [vmem:[%s3 + $0x20] sm:$0xff]
  %v42 = vld [vmem:[%s3 + $0x28] sm:$0xff]
  %v43 = vld [vmem:[%s3 + $0x30] sm:$0xff]
  %v44 = vld [vmem:[%s3 + $0x38] sm:$0xff]
  %v45 = vld [vmem:[%s3 + $0x40] sm:$0xff]
  %v46 = vld [vmem:[%s3 + $0x48] sm:$0xff]
  %v47 = vld [vmem:[%s3 + $0x50] sm:$0xff]
  %v48 = vld [vmem:[%s3 + $0x58] sm:$0xff]
  %v49 = vld [vmem:[%s3 + $0x60] sm:$0xff]
  %v50 = vld [vmem:[%s3 + $0x68] sm:$0xff]
  %v51 = vld [vmem:[%s3 + $0x70] sm:$0xff]
  %v52 = vld [vmem:[%s3 + $0x78] sm:$0xff]
  %v53 = vld [vmem:[%s3 + $0x80] sm:$0xff]
  %v54 = vld [vmem:[%s3 + $0x88] sm:$0xff]
  %v55 = vld [vmem:[%s3 + $0x90] sm:$0xff]
  %v56 = vld [vmem:[%s3 + $0x98] sm:$0xff]
  %v57 = vld [vmem:[%s3 + $0xa0] sm:$0xff]
  %v58 = vld [vmem:[%s3 + $0xa8] sm:$0xff]
  %v59 = vld [vmem:[%s3 + $0xb0] sm:$0xff]
  %v60 = vld [vmem:[%s3 + $0xb8] sm:$0xff]
  %v61 = vld [vmem:[%s3 + $0xc0] sm:$0xff]
  %v62 = vld [vmem:[%s3 + $0xc8] sm:$0xff]
  %v63 = vld [vmem:[%s3 + $0xd0] sm:$0xff]
  %v64 = vld [vmem:[%s3 + $0xd8] sm:$0xff]
  %v65 = vld [vmem:[%s3 + $0xe0] sm:$0xff]
  %v66 = vld [vmem:[%s3 + $0xe8] sm:$0xff]
  %v67 = vld [vmem:[%s3 + $0xf0] sm:$0xff]
  %v68 = vld [vmem:[%s3 + $0xf8] sm:$0xff]
  %v69 = vld [vmem:[%s5] sm:$0xff]
  %v70 = vld [vmem:[%s5 + $0x8] sm:$0xff]
  %v71 = vld [vmem:[%s5 + $0x10] sm:$0xff]
  %v72 = vld [vmem:[%s5 + $0x18] sm:$0xff]
  %v73 = vld [vmem:[%s5 + $0x20] sm:$0xff]
  %v74 = vld [vmem:[%s5 + $0x28] sm:$0xff]
  %v75 = vld [vmem:[%s5 + $0x30] sm:$0xff]
  %v76 = vld [vmem:[%s5 + $0x38] sm:$0xff]
  %v77 = vld [vmem:[%s5 + $0x40] sm:$0xff]
  %v78 = vld [vmem:[%s5 + $0x48] sm:$0xff]
  %v79 = vld [vmem:[%s5 + $0x50] sm:$0xff]
  %v80 = vld [vmem:[%s5 + $0x58] sm:$0xff]
  %v81 = vld [vmem:[%s5 + $0x60] sm:$0xff]
  %v82 = vld [vmem:[%s5 + $0x68] sm:$0xff]
  %v83 = vld [vmem:[%s5 + $0x70] sm:$0xff]
  %v84 = vld [vmem:[%s5 + $0x78] sm:$0xff]
  %v85 = vld [vmem:[%s5 + $0x80] sm:$0xff]
  %v86 = vld [vmem:[%s5 + $0x88] sm:$0xff]
  %v87 = vld [vmem:[%s5 + $0x90] sm:$0xff]
  %v88 = vld [vmem:[%s5 + $0x98] sm:$0xff]
  %v89 = vld [vmem:[%s5 + $0xa0] sm:$0xff]
  %v90 = vld [vmem:[%s5 + $0xa8] sm:$0xff]
  %v91 = vld [vmem:[%s5 + $0xb0] sm:$0xff]
  %v92 = vld [vmem:[%s5 + $0xb8] sm:$0xff]
  %v93 = vld [vmem:[%s5 + $0xc0] sm:$0xff]
  %v94 = vld [vmem:[%s5 + $0xc8] sm:$0xff]
  %v95 = vld [vmem:[%s5 + $0xd0] sm:$0xff]
  %v96 = vld [vmem:[%s5 + $0xd8] sm:$0xff]
  %v97 = vld [vmem:[%s5 + $0xe0] sm:$0xff]
  %v98 = vld [vmem:[%s5 + $0xe8] sm:$0xff]
  %v99 = vld [vmem:[%s5 + $0xf0] sm:$0xff]
  %v100 = vld [vmem:[%s5 + $0xf8] sm:$0xff]
  %v101 = vld [vmem:[%s7] sm:$0xf]
  %v102 = vld [vmem:[%s7 + $0x4] sm:$0xf]
  %v103 = vld [vmem:[%s7 + $0x8] sm:$0xf]
  %v104 = vld [vmem:[%s7 + $0xc] sm:$0xf]
  %v105 = vld [vmem:[%s7 + $0x10] sm:$0xf]
  %v106 = vld [vmem:[%s7 + $0x14] sm:$0xf]
  %v107 = vld [vmem:[%s7 + $0x18] sm:$0xf]
  %v108 = vld [vmem:[%s7 + $0x1c] sm:$0xf]
  %v109 = vld [vmem:[%s7 + $0x20] sm:$0xf]
  %v110 = vld [vmem:[%s7 + $0x24] sm:$0xf]
  %v111 = vld [vmem:[%s7 + $0x28] sm:$0xf]
  %v112 = vld [vmem:[%s7 + $0x2c] sm:$0xf]
  %v113 = vld [vmem:[%s7 + $0x30] sm:$0xf]
  %v114 = vld [vmem:[%s7 + $0x34] sm:$0xf]
  %v115 = vld [vmem:[%s7 + $0x38] sm:$0xf]
  %v116 = vld [vmem:[%s7 + $0x3c] sm:$0xf]
  %v117 = vld [vmem:[%s7 + $0x40] sm:$0xf]
  %v118 = vld [vmem:[%s7 + $0x44] sm:$0xf]
  %v119 = vld [vmem:[%s7 + $0x48] sm:$0xf]
  %v120 = vld [vmem:[%s7 + $0x4c] sm:$0xf]
  %v121 = vld [vmem:[%s7 + $0x50] sm:$0xf]
  %v122 = vld [vmem:[%s7 + $0x54] sm:$0xf]
  %v123 = vld [vmem:[%s7 + $0x58] sm:$0xf]
  %v124 = vld [vmem:[%s7 + $0x5c] sm:$0xf]
  %v125 = vld [vmem:[%s7 + $0x60] sm:$0xf]
  %v126 = vld [vmem:[%s7 + $0x64] sm:$0xf]
  %v127 = vld [vmem:[%s7 + $0x68] sm:$0xf]
  %v128 = vld [vmem:[%s7 + $0x6c] sm:$0xf]
  %v129 = vld [vmem:[%s7 + $0x70] sm:$0xf]
  %v130 = vld [vmem:[%s7 + $0x74] sm:$0xf]
  %v131 = vld [vmem:[%s7 + $0x78] sm:$0xf]
  %v132 = vld [vmem:[%s7 + $0x7c] sm:$0xf]
  %v133 = vld [vmem:[%s2] sm:$0x3]
  %v134 = vld [vmem:[%s4] sm:$0x3]
  %v135 = vld [vmem:[%s6] sm:$0x3]
  %v136 = vld [vmem:[%s8] sm:$0x1]
  %v137 = vld [vmem:[%s0] sm:$0xf]
  %v139 = vperm.slane %v133, 0
  %v140 = vperm.slane %v133, 1
  %v147 = vunpack.c.l.b16 %v33
  %v148 = vunpack.c.h.b16 %v33
  %v149 = vunpack.c.l.b16 %v34
  %v150 = vunpack.c.h.b16 %v34
  %v151 = vunpack.c.l.b16 %v35
  %v152 = vunpack.c.h.b16 %v35
  %v153 = vunpack.c.l.b16 %v36
  %v154 = vunpack.c.h.b16 %v36
  %v155 = vpack.c.b16 %v149, %v147
  %v156 = vpack.c.b16 %v150, %v148
  %v157 = vpack.c.b16 %v153, %v151
  %v158 = vpack.c.b16 %v154, %v152
  %vm163 = vcmask 261120
  %v165 = vsel %vm163, %v137, 0
  %167 = vmatpush.bf16.msra.mxu0 0
  %168 = vmatpush.bf16.msra.mxu0 0
  %169 = vmatpush.bf16.msra.mxu0 0
  %170 = vmatpush.bf16.msra.mxu0 0
  %171 = vmatpush.bf16.msra.mxu0 0
  %172 = vmatpush.bf16.msra.mxu0 0
  %173 = vmatpush.bf16.msra.mxu0 %v157
  %174 = vmatpush.bf16.msra.mxu0 %v155
  %175 = vmatmul.bf16.gmra.mxu0 %v165
  %v176 = vpop.f32.mrf.mxu0
  %v177 = vadd.f32 %v139, %v176
  %v178 = vpop.f32.mrf.mxu0
  %179 = vdwg.mxu0
  %180 = vmatpush.bf16.msra.mxu0 0
  %181 = vmatpush.bf16.msra.mxu0 0
  %182 = vmatpush.bf16.msra.mxu0 0
  %183 = vmatpush.bf16.msra.mxu0 0
  %184 = vmatpush.bf16.msra.mxu0 0
  %185 = vmatpush.bf16.msra.mxu0 0
  %186 = vmatpush.bf16.msra.mxu0 %v158
  %187 = vmatpush.bf16.msra.mxu0 %v156
  %188 = vmatmul.bf16.gmra.mxu0 %v165
  %v189 = vpop.f32.mrf.mxu0
  %v190 = vadd.f32 %v140, %v189
  %v191 = vpop.f32.mrf.mxu0
  %192 = vdwg.mxu0
  %vm193 = vcmp.gt.f32.partialorder %v177, 0.0
  %vm194 = vcmp.gt.f32.partialorder %v190, 0.0
  %v195 = vmul.f32 %v177, 0.1
  %v196 = vmul.f32 %v190, 0.1
  %v197 = vsel %vm193, %v177, %v195
  %v198 = vsel %vm194, %v190, %v196
  %v199 = vpack.c.bf16 %v197, %v197
  %v200 = vpack.c.bf16 %v198, %v198
  %v202 = vperm.slane %v134, 0
  %v203 = vperm.slane %v134, 1
  %v238 = vunpack.c.l.b16 %v37
  %v239 = vunpack.c.h.b16 %v37
  %v240 = vunpack.c.l.b16 %v38
  %v241 = vunpack.c.h.b16 %v38
  %v242 = vunpack.c.l.b16 %v39
  %v243 = vunpack.c.h.b16 %v39
  %v244 = vunpack.c.l.b16 %v40
  %v245 = vunpack.c.h.b16 %v40
  %v246 = vunpack.c.l.b16 %v41
  %v247 = vunpack.c.h.b16 %v41
  %v248 = vunpack.c.l.b16 %v42
  %v249 = vunpack.c.h.b16 %v42
  %v250 = vunpack.c.l.b16 %v43
  %v251 = vunpack.c.h.b16 %v43
  %v252 = vunpack.c.l.b16 %v44
  %v253 = vunpack.c.h.b16 %v44
  %v254 = vunpack.c.l.b16 %v45
  %v255 = vunpack.c.h.b16 %v45
  %v256 = vunpack.c.l.b16 %v46
  %v257 = vunpack.c.h.b16 %v46
  %v258 = vunpack.c.l.b16 %v47
  %v259 = vunpack.c.h.b16 %v47
  %v260 = vunpack.c.l.b16 %v48
  %v261 = vunpack.c.h.b16 %v48
  %v262 = vunpack.c.l.b16 %v49
  %v263 = vunpack.c.h.b16 %v49
  %v264 = vunpack.c.l.b16 %v50
  %v265 = vunpack.c.h.b16 %v50
  %v266 = vunpack.c.l.b16 %v51
  %v267 = vunpack.c.h.b16 %v51
  %v268 = vunpack.c.l.b16 %v52
  %v269 = vunpack.c.h.b16 %v52
  %v270 = vunpack.c.l.b16 %v53
  %v271 = vunpack.c.h.b16 %v53
  %v272 = vunpack.c.l.b16 %v54
  %v273 = vunpack.c.h.b16 %v54
  %v274 = vunpack.c.l.b16 %v55
  %v275 = vunpack.c.h.b16 %v55
  %v276 = vunpack.c.l.b16 %v56
  %v277 = vunpack.c.h.b16 %v56
  %v278 = vunpack.c.l.b16 %v57
  %v279 = vunpack.c.h.b16 %v57
  %v280 = vunpack.c.l.b16 %v58
  %v281 = vunpack.c.h.b16 %v58
  %v282 = vunpack.c.l.b16 %v59
  %v283 = vunpack.c.h.b16 %v59
  %v284 = vunpack.c.l.b16 %v60
  %v285 = vunpack.c.h.b16 %v60
  %v286 = vunpack.c.l.b16 %v61
  %v287 = vunpack.c.h.b16 %v61
  %v288 = vunpack.c.l.b16 %v62
  %v289 = vunpack.c.h.b16 %v62
  %v290 = vunpack.c.l.b16 %v63
  %v291 = vunpack.c.h.b16 %v63
  %v292 = vunpack.c.l.b16 %v64
  %v293 = vunpack.c.h.b16 %v64
  %v294 = vunpack.c.l.b16 %v65
  %v295 = vunpack.c.h.b16 %v65
  %v296 = vunpack.c.l.b16 %v66
  %v297 = vunpack.c.h.b16 %v66
  %v298 = vunpack.c.l.b16 %v67
  %v299 = vunpack.c.h.b16 %v67
  %v300 = vunpack.c.l.b16 %v68
  %v301 = vunpack.c.h.b16 %v68
  %v302 = vpack.c.b16 %v240, %v238
  %v303 = vpack.c.b16 %v241, %v239
  %v304 = vpack.c.b16 %v244, %v242
  %v305 = vpack.c.b16 %v245, %v243
  %v306 = vpack.c.b16 %v248, %v246
  %v307 = vpack.c.b16 %v249, %v247
  %v308 = vpack.c.b16 %v252, %v250
  %v309 = vpack.c.b16 %v253, %v251
  %v310 = vpack.c.b16 %v256, %v254
  %v311 = vpack.c.b16 %v257, %v255
  %v312 = vpack.c.b16 %v260, %v258
  %v313 = vpack.c.b16 %v261, %v259
  %v314 = vpack.c.b16 %v264, %v262
  %v315 = vpack.c.b16 %v265, %v263
  %v316 = vpack.c.b16 %v268, %v266
  %v317 = vpack.c.b16 %v269, %v267
  %v318 = vpack.c.b16 %v272, %v270
  %v319 = vpack.c.b16 %v273, %v271
  %v320 = vpack.c.b16 %v276, %v274
  %v321 = vpack.c.b16 %v277, %v275
  %v322 = vpack.c.b16 %v280, %v278
  %v323 = vpack.c.b16 %v281, %v279
  %v324 = vpack.c.b16 %v284, %v282
  %v325 = vpack.c.b16 %v285, %v283
  %v326 = vpack.c.b16 %v288, %v286
  %v327 = vpack.c.b16 %v289, %v287
  %v328 = vpack.c.b16 %v292, %v290
  %v329 = vpack.c.b16 %v293, %v291
  %v330 = vpack.c.b16 %v296, %v294
  %v331 = vpack.c.b16 %v297, %v295
  %v332 = vpack.c.b16 %v300, %v298
  %v333 = vpack.c.b16 %v301, %v299
  %366 = vmatpush.bf16.msra.mxu0 %v316
  %367 = vmatpush.bf16.msra.mxu0 %v314
  %368 = vmatpush.bf16.msra.mxu0 %v312
  %369 = vmatpush.bf16.msra.mxu0 %v310
  %370 = vmatpush.bf16.msra.mxu0 %v308
  %371 = vmatpush.bf16.msra.mxu0 %v306
  %372 = vmatpush.bf16.msra.mxu0 %v304
  %373 = vmatpush.bf16.msra.mxu0 %v302
  %374 = vmatmul.bf16.gmra.mxu0 %v199
  %v375 = vpop.f32.mrf.mxu0
  %v376 = vadd.f32 %v202, %v375
  %v377 = vpop.f32.mrf.mxu0
  %378 = vdwg.mxu0
  %379 = vmatpush.bf16.msra.mxu0 %v332
  %380 = vmatpush.bf16.msra.mxu0 %v330
  %381 = vmatpush.bf16.msra.mxu0 %v328
  %382 = vmatpush.bf16.msra.mxu0 %v326
  %383 = vmatpush.bf16.msra.mxu0 %v324
  %384 = vmatpush.bf16.msra.mxu0 %v322
  %385 = vmatpush.bf16.msra.mxu0 %v320
  %386 = vmatpush.bf16.msra.mxu0 %v318
  %387 = vmatmul.bf16.gmra.mxu0 %v200
  %v388 = vpop.f32.mrf.mxu0
  %v389 = vadd.f32 %v376, %v388
  %v390 = vpop.f32.mrf.mxu0
  %391 = vdwg.mxu0
  %392 = vmatpush.bf16.msra.mxu0 %v317
  %393 = vmatpush.bf16.msra.mxu0 %v315
  %394 = vmatpush.bf16.msra.mxu0 %v313
  %395 = vmatpush.bf16.msra.mxu0 %v311
  %396 = vmatpush.bf16.msra.mxu0 %v309
  %397 = vmatpush.bf16.msra.mxu0 %v307
  %398 = vmatpush.bf16.msra.mxu0 %v305
  %399 = vmatpush.bf16.msra.mxu0 %v303
  %400 = vmatmul.bf16.gmra.mxu0 %v199
  %v401 = vpop.f32.mrf.mxu0
  %v402 = vadd.f32 %v203, %v401
  %v403 = vpop.f32.mrf.mxu0
  %404 = vdwg.mxu0
  %405 = vmatpush.bf16.msra.mxu0 %v333
  %406 = vmatpush.bf16.msra.mxu0 %v331
  %407 = vmatpush.bf16.msra.mxu0 %v329
  %408 = vmatpush.bf16.msra.mxu0 %v327
  %409 = vmatpush.bf16.msra.mxu0 %v325
  %410 = vmatpush.bf16.msra.mxu0 %v323
  %411 = vmatpush.bf16.msra.mxu0 %v321
  %412 = vmatpush.bf16.msra.mxu0 %v319
  %413 = vmatmul.bf16.gmra.mxu0 %v200
  %v414 = vpop.f32.mrf.mxu0
  %v415 = vadd.f32 %v402, %v414
  %v416 = vpop.f32.mrf.mxu0
  %417 = vdwg.mxu0
  %v418 = vmax.f32 %v389, 0.0
  %v419 = vmax.f32 %v415, 0.0
  %v420 = vpack.c.bf16 %v418, %v418
  %v421 = vpack.c.bf16 %v419, %v419
  %v423 = vperm.slane %v135, 0
  %v424 = vperm.slane %v135, 1
  %v459 = vunpack.c.l.b16 %v69
  %v460 = vunpack.c.h.b16 %v69
  %v461 = vunpack.c.l.b16 %v70
  %v462 = vunpack.c.h.b16 %v70
  %v463 = vunpack.c.l.b16 %v71
  %v464 = vunpack.c.h.b16 %v71
  %v465 = vunpack.c.l.b16 %v72
  %v466 = vunpack.c.h.b16 %v72
  %v467 = vunpack.c.l.b16 %v73
  %v468 = vunpack.c.h.b16 %v73
  %v469 = vunpack.c.l.b16 %v74
  %v470 = vunpack.c.h.b16 %v74
  %v471 = vunpack.c.l.b16 %v75
  %v472 = vunpack.c.h.b16 %v75
  %v473 = vunpack.c.l.b16 %v76
  %v474 = vunpack.c.h.b16 %v76
  %v475 = vunpack.c.l.b16 %v77
  %v476 = vunpack.c.h.b16 %v77
  %v477 = vunpack.c.l.b16 %v78
  %v478 = vunpack.c.h.b16 %v78
  %v479 = vunpack.c.l.b16 %v79
  %v480 = vunpack.c.h.b16 %v79
  %v481 = vunpack.c.l.b16 %v80
  %v482 = vunpack.c.h.b16 %v80
  %v483 = vunpack.c.l.b16 %v81
  %v484 = vunpack.c.h.b16 %v81
  %v485 = vunpack.c.l.b16 %v82
  %v486 = vunpack.c.h.b16 %v82
  %v487 = vunpack.c.l.b16 %v83
  %v488 = vunpack.c.h.b16 %v83
  %v489 = vunpack.c.l.b16 %v84
  %v490 = vunpack.c.h.b16 %v84
  %v491 = vunpack.c.l.b16 %v85
  %v492 = vunpack.c.h.b16 %v85
  %v493 = vunpack.c.l.b16 %v86
  %v494 = vunpack.c.h.b16 %v86
  %v495 = vunpack.c.l.b16 %v87
  %v496 = vunpack.c.h.b16 %v87
  %v497 = vunpack.c.l.b16 %v88
  %v498 = vunpack.c.h.b16 %v88
  %v499 = vunpack.c.l.b16 %v89
  %v500 = vunpack.c.h.b16 %v89
  %v501 = vunpack.c.l.b16 %v90
  %v502 = vunpack.c.h.b16 %v90
  %v503 = vunpack.c.l.b16 %v91
  %v504 = vunpack.c.h.b16 %v91
  %v505 = vunpack.c.l.b16 %v92
  %v506 = vunpack.c.h.b16 %v92
  %v507 = vunpack.c.l.b16 %v93
  %v508 = vunpack.c.h.b16 %v93
  %v509 = vunpack.c.l.b16 %v94
  %v510 = vunpack.c.h.b16 %v94
  %v511 = vunpack.c.l.b16 %v95
  %v512 = vunpack.c.h.b16 %v95
  %v513 = vunpack.c.l.b16 %v96
  %v514 = vunpack.c.h.b16 %v96
  %v515 = vunpack.c.l.b16 %v97
  %v516 = vunpack.c.h.b16 %v97
  %v517 = vunpack.c.l.b16 %v98
  %v518 = vunpack.c.h.b16 %v98
  %v519 = vunpack.c.l.b16 %v99
  %v520 = vunpack.c.h.b16 %v99
  %v521 = vunpack.c.l.b16 %v100
  %v522 = vunpack.c.h.b16 %v100
  %v523 = vpack.c.b16 %v461, %v459
  %v524 = vpack.c.b16 %v462, %v460
  %v525 = vpack.c.b16 %v465, %v463
  %v526 = vpack.c.b16 %v466, %v464
  %v527 = vpack.c.b16 %v469, %v467
  %v528 = vpack.c.b16 %v470, %v468
  %v529 = vpack.c.b16 %v473, %v471
  %v530 = vpack.c.b16 %v474, %v472
  %v531 = vpack.c.b16 %v477, %v475
  %v532 = vpack.c.b16 %v478, %v476
  %v533 = vpack.c.b16 %v481, %v479
  %v534 = vpack.c.b16 %v482, %v480
  %v535 = vpack.c.b16 %v485, %v483
  %v536 = vpack.c.b16 %v486, %v484
  %v537 = vpack.c.b16 %v489, %v487
  %v538 = vpack.c.b16 %v490, %v488
  %v539 = vpack.c.b16 %v493, %v491
  %v540 = vpack.c.b16 %v494, %v492
  %v541 = vpack.c.b16 %v497, %v495
  %v542 = vpack.c.b16 %v498, %v496
  %v543 = vpack.c.b16 %v501, %v499
  %v544 = vpack.c.b16 %v502, %v500
  %v545 = vpack.c.b16 %v505, %v503
  %v546 = vpack.c.b16 %v506, %v504
  %v547 = vpack.c.b16 %v509, %v507
  %v548 = vpack.c.b16 %v510, %v508
  %v549 = vpack.c.b16 %v513, %v511
  %v550 = vpack.c.b16 %v514, %v512
  %v551 = vpack.c.b16 %v517, %v515
  %v552 = vpack.c.b16 %v518, %v516
  %v553 = vpack.c.b16 %v521, %v519
  %v554 = vpack.c.b16 %v522, %v520
  %587 = vmatpush.bf16.msra.mxu0 %v537
  %588 = vmatpush.bf16.msra.mxu0 %v535
  %589 = vmatpush.bf16.msra.mxu0 %v533
  %590 = vmatpush.bf16.msra.mxu0 %v531
  %591 = vmatpush.bf16.msra.mxu0 %v529
  %592 = vmatpush.bf16.msra.mxu0 %v527
  %593 = vmatpush.bf16.msra.mxu0 %v525
  %594 = vmatpush.bf16.msra.mxu0 %v523
  %595 = vmatmul.bf16.gmra.mxu0 %v420
  %v596 = vpop.f32.mrf.mxu0
  %v597 = vadd.f32 %v423, %v596
  %v598 = vpop.f32.mrf.mxu0
  %599 = vdwg.mxu0
  %600 = vmatpush.bf16.msra.mxu0 %v553
  %601 = vmatpush.bf16.msra.mxu0 %v551
  %602 = vmatpush.bf16.msra.mxu0 %v549
  %603 = vmatpush.bf16.msra.mxu0 %v547
  %604 = vmatpush.bf16.msra.mxu0 %v545
  %605 = vmatpush.bf16.msra.mxu0 %v543
  %606 = vmatpush.bf16.msra.mxu0 %v541
  %607 = vmatpush.bf16.msra.mxu0 %v539
  %608 = vmatmul.bf16.gmra.mxu0 %v421
  %v609 = vpop.f32.mrf.mxu0
  %v610 = vadd.f32 %v597, %v609
  %v611 = vpop.f32.mrf.mxu0
  %612 = vdwg.mxu0
  %613 = vmatpush.bf16.msra.mxu0 %v538
  %614 = vmatpush.bf16.msra.mxu0 %v536
  %615 = vmatpush.bf16.msra.mxu0 %v534
  %616 = vmatpush.bf16.msra.mxu0 %v532
  %617 = vmatpush.bf16.msra.mxu0 %v530
  %618 = vmatpush.bf16.msra.mxu0 %v528
  %619 = vmatpush.bf16.msra.mxu0 %v526
  %620 = vmatpush.bf16.msra.mxu0 %v524
  %621 = vmatmul.bf16.gmra.mxu0 %v420
  %v622 = vpop.f32.mrf.mxu0
  %v623 = vadd.f32 %v424, %v622
  %v624 = vpop.f32.mrf.mxu0
  %625 = vdwg.mxu0
  %626 = vmatpush.bf16.msra.mxu0 %v554
  %627 = vmatpush.bf16.msra.mxu0 %v552
  %628 = vmatpush.bf16.msra.mxu0 %v550
  %629 = vmatpush.bf16.msra.mxu0 %v548
  %630 = vmatpush.bf16.msra.mxu0 %v546
  %631 = vmatpush.bf16.msra.mxu0 %v544
  %632 = vmatpush.bf16.msra.mxu0 %v542
  %633 = vmatpush.bf16.msra.mxu0 %v540
  %634 = vmatmul.bf16.gmra.mxu0 %v421
  %v635 = vpop.f32.mrf.mxu0
  %v636 = vadd.f32 %v623, %v635
  %v637 = vpop.f32.mrf.mxu0
  %638 = vdwg.mxu0
  %v639 = vmax.f32 %v610, 0.0
  %v640 = vmax.f32 %v636, 0.0
  %v641 = vpack.c.bf16 %v639, %v639
  %v642 = vpack.c.bf16 %v640, %v640
  %v644 = vperm.slane %v136, 0
  %v678 = vunpack.c.l.b16 %v101
  %v679 = vunpack.c.l.b16 %v102
  %v680 = vunpack.c.l.b16 %v103
  %v681 = vunpack.c.l.b16 %v104
  %v682 = vunpack.c.l.b16 %v105
  %v683 = vunpack.c.l.b16 %v106
  %v684 = vunpack.c.l.b16 %v107
  %v685 = vunpack.c.l.b16 %v108
  %v686 = vunpack.c.l.b16 %v109
  %v687 = vunpack.c.l.b16 %v110
  %v688 = vunpack.c.l.b16 %v111
  %v689 = vunpack.c.l.b16 %v112
  %v690 = vunpack.c.l.b16 %v113
  %v691 = vunpack.c.l.b16 %v114
  %v692 = vunpack.c.l.b16 %v115
  %v693 = vunpack.c.l.b16 %v116
  %v694 = vunpack.c.l.b16 %v117
  %v695 = vunpack.c.l.b16 %v118
  %v696 = vunpack.c.l.b16 %v119
  %v697 = vunpack.c.l.b16 %v120
  %v698 = vunpack.c.l.b16 %v121
  %v699 = vunpack.c.l.b16 %v122
  %v700 = vunpack.c.l.b16 %v123
  %v701 = vunpack.c.l.b16 %v124
  %v702 = vunpack.c.l.b16 %v125
  %v703 = vunpack.c.l.b16 %v126
  %v704 = vunpack.c.l.b16 %v127
  %v705 = vunpack.c.l.b16 %v128
  %v706 = vunpack.c.l.b16 %v129
  %v707 = vunpack.c.l.b16 %v130
  %v708 = vunpack.c.l.b16 %v131
  %v709 = vunpack.c.l.b16 %v132
  %v710 = vpack.c.b16 %v679, %v678
  %v711 = vpack.c.b16 %v681, %v680
  %v712 = vpack.c.b16 %v683, %v682
  %v713 = vpack.c.b16 %v685, %v684
  %v714 = vpack.c.b16 %v687, %v686
  %v715 = vpack.c.b16 %v689, %v688
  %v716 = vpack.c.b16 %v691, %v690
  %v717 = vpack.c.b16 %v693, %v692
  %v718 = vpack.c.b16 %v695, %v694
  %v719 = vpack.c.b16 %v697, %v696
  %v720 = vpack.c.b16 %v699, %v698
  %v721 = vpack.c.b16 %v701, %v700
  %v722 = vpack.c.b16 %v703, %v702
  %v723 = vpack.c.b16 %v705, %v704
  %v724 = vpack.c.b16 %v707, %v706
  %v725 = vpack.c.b16 %v709, %v708
  %742 = vmatpush.bf16.msra.mxu0 %v717
  %743 = vmatpush.bf16.msra.mxu0 %v716
  %744 = vmatpush.bf16.msra.mxu0 %v715
  %745 = vmatpush.bf16.msra.mxu0 %v714
  %746 = vmatpush.bf16.msra.mxu0 %v713
  %747 = vmatpush.bf16.msra.mxu0 %v712
  %748 = vmatpush.bf16.msra.mxu0 %v711
  %749 = vmatpush.bf16.msra.mxu0 %v710
  %750 = vmatmul.bf16.gmra.mxu0 %v641
  %v751 = vpop.f32.mrf.mxu0
  %v752 = vadd.f32 %v644, %v751
  %v753 = vpop.f32.mrf.mxu0
  %754 = vdwg.mxu0
  %755 = vmatpush.bf16.msra.mxu0 %v725
  %756 = vmatpush.bf16.msra.mxu0 %v724
  %757 = vmatpush.bf16.msra.mxu0 %v723
  %758 = vmatpush.bf16.msra.mxu0 %v722
  %759 = vmatpush.bf16.msra.mxu0 %v721
  %760 = vmatpush.bf16.msra.mxu0 %v720
  %761 = vmatpush.bf16.msra.mxu0 %v719
  %762 = vmatpush.bf16.msra.mxu0 %v718
  %763 = vmatmul.bf16.gmra.mxu0 %v642
  %v764 = vpop.f32.mrf.mxu0
  %v765 = vadd.f32 %v752, %v764
  %v766 = vpop.f32.mrf.mxu0
  %767 = vdwg.mxu0
  %v768 = vxor.u32 %v765, 2147483648
  %v769 = vmul.f32 %v768, 1.442695
  %v770 = vpow.pop %v769
  %v771 = vadd.f32 %v770, 1.0
  %v772 = vrcp.pop %v771
  %v773 = vmul.f32 %v771, %v772
  %v774 = vsub.f32 1.0, %v773
  %v775 = vmul.f32 %v772, %v774
  %v776 = vadd.f32 %v772, %v775
  %vm777 = vweird.f32 %v771
  %vm778 = vweird.f32 %v772
  %vm779 = vmor %vm777, %vm778
  %v780 = vsel %vm779, %v772, %v776
  %v781 = vand.u32 2147483647, %v771
  %vm782 = vcmp.eq.f32.partialorder %v781, 8.507059e+37
  %v783 = vand.u32 %v771, 2147483648
  %v784 = vor.u32 1.1754944e-38, %v783
  %v785 = vsel %vm782, %v784, %v780
  %v786 = vmul.f32 1.0, %v785
  %787 = vst [vmem:[%s9] sm:$0xff] %v786
  // Predicated region
  $region38: #{ann_forward.1} parent=0 // pred_check
    _
  $region39: #{ann_forward.1} parent=0 // pred_check_branch
    %789 = sbr.rel (0) target = $region41
  $region40: #{ann_forward.1} parent=0 // pred_region
    _
  $region41: #{ann_forward.1} parent=0 // pred_fallthru
    _
  // Predicated region
  $region42: #{ann_forward.1} parent=0 // pred_check
    _
  $region43: #{ann_forward.1} parent=0 // pred_check_branch
    %791 = sbr.rel (0) target = $region45
  $region44: #{ann_forward.1} parent=0 // pred_region
    _
  $region45: #{ann_forward.1} parent=0 // pred_fallthru
    _

</llo_original>
